<compile_context>
chip_gen: v6e
topology: v6e:2x2x1
jax: 0.10.0
libtpu: 0.0.40
codegen_flags: <defaults>
</compile_context>

<pallas_src>
import functools

import jax
import jax.numpy as jnp
from jax.experimental import pallas as pl
from jax.experimental.pallas import tpu as pltpu


def _round_up(x, m):
    return (x + m - 1) // m * m


def _balanced_tile(dim, tile_max, align):
    """Aligned tile size with balanced blocks (minimal padding).

    Returns (tile, padded_dim) with padded_dim % tile == 0. Avoids e.g.
    B=300 with tile_max=256 padding all the way to 512 (pads to 304 instead).
    """
    dim_aligned = _round_up(dim, align)
    tile_cap = max(align, min(dim_aligned, _round_up(tile_max, align)))
    nblocks = -(-dim // tile_cap)                # ceil
    tile = _round_up(-(-dim // nblocks), align)  # ceil, aligned
    return tile, tile * nblocks


def _vmem_limit_kwargs(est_bytes):
    # Raise the scoped-VMEM limit only when the working set exceeds the
    # smallest per-generation default (16 MiB on v5e); keep the request well
    # under v7x's 64 MiB physical VMEM.
    if est_bytes <= 12 * 2**20:
        return {}
    return {"vmem_limit_bytes": int(min(max(2 * est_bytes, 16 * 2**20), 48 * 2**20))}


def _apply_activation(out, activation):
    if activation == "sigmoid":
        return jax.nn.sigmoid(out)        # EUP slot — hidden under MXU/DMA
    return jnp.maximum(out, 0.0)          # relu (default), VPU slot


def _fc_kernel_resident(x_ref, w_ref, b_ref, o_ref, *, activation):
    # x_ref: (tm, K)  w_ref: (K, Np) -- resident, DMA'd once  b_ref: (1, Np)
    out = jnp.dot(x_ref[...], w_ref[...], preferred_element_type=jnp.float32)
    out = out + b_ref[...]
    o_ref[...] = _apply_activation(out, activation).astype(o_ref.dtype)


def _fc_kernel_tiled(x_ref, w_ref, b_ref, o_ref, *, activation):
    # x_ref: (tm, tk)  w_ref: (tk, tn)  b_ref: (Nt, tn) -- whole bias, loaded once
    # o_ref: (tm, tn) f32 -- doubles as the accumulator (resident across k).
    j = pl.program_id(1)
    k = pl.program_id(2)

    partial = jnp.dot(x_ref[...], w_ref[...], preferred_element_type=jnp.float32)

    @pl.when(k == 0)
    def _():
        o_ref[...] = partial

    @pl.when(k != 0)
    def _():
        o_ref[...] += partial

    @pl.when(k == pl.num_programs(2) - 1)
    def _():
        bias = b_ref[pl.ds(j, 1), :]                       # (1, tn) row for this j
        o_ref[...] = _apply_activation(o_ref[...] + bias, activation).astype(o_ref.dtype)


class FCLayerPallas:
    """Pallas port of FCLayer.forward: activation(x @ W^T + b).

    Parameters are padded / transposed once here (not per forward call).
    `batch_norm` is accepted for API parity but has no effect, matching the
    original module whose forward overwrites the batch-norm branch.
    """

    def __init__(self, weight, bias, activation="relu", batch_norm=False, *,
                 compute_dtype=jnp.float32, tm_max=512, tn_max=512, tk_max=1024,
                 weight_resident_limit_bytes=8 * 2**20):
        del batch_norm  # no-op by the original module's (buggy) forward
        if activation not in ("relu", "sigmoid"):
            raise ValueError(f"unsupported activation: {activation}")

        weight = jnp.asarray(weight, dtype=jnp.float32)
        bias = jnp.asarray(bias, dtype=jnp.float32)
        cout, cin = weight.shape
        assert bias.shape == (cout,), "bias/out_features mismatch"

        self.in_features = cin
        self.out_features = cout
        self.activation = activation
        self.compute_dtype = jnp.dtype(compute_dtype)
        self.tm_max = tm_max

        w_item = self.compute_dtype.itemsize
        np_lane = _round_up(cout, 128)
        # Weight-resident path whenever the (lane-padded) weight comfortably
        # fits every generation's VMEM budget (784x400 f32 ~ 1.25 MiB easily
        # qualifies); otherwise the general tiled path.
        self.resident = cin * np_lane * w_item <= weight_resident_limit_bytes

        if self.resident:
            self.tn, self.Np = np_lane, np_lane
            self.tk, self.Kp = cin, cin       # full-K block: no K padding needed
        else:
            self.tn, self.Np = _balanced_tile(cout, tn_max, 128)
            self.tk, self.Kp = _balanced_tile(cin, tk_max, 128)

        # One-time parameter prep: canonical (K, N) RHS layout + lane padding.
        w_t = weight.T.astype(self.compute_dtype)              # (Cin, Cout)
        if (self.Kp, self.Np) != (cin, cout):
            w_t = jnp.pad(w_t, ((0, self.Kp - cin), (0, self.Np - cout)))
        self.weight_t = w_t                                    # (Kp, Np)

        b2d = bias.reshape(1, cout)
        if self.Np != cout:
            b2d = jnp.pad(b2d, ((0, 0), (0, self.Np - cout)))
        if self.resident:
            self.bias2d = b2d                                  # (1, Np)
        else:
            # Blocks-first layout so the kernel picks row j with a cheap
            # dynamic sublane slice (bias loaded once per call).
            self.bias_blocks = b2d.reshape(self.Np // self.tn, self.tn)

    def __call__(self, x):
        B, cin = x.shape
        if cin != self.in_features:
            raise ValueError("input feature mismatch")
        x = x.astype(self.compute_dtype)
        tm, Mp = _balanced_tile(B, self.tm_max, 8)
        if self.resident:
            out = self._call_resident(x, B, tm, Mp)
        else:
            out = self._call_tiled(x, B, tm, Mp)
        return out[:B, :self.out_features]

    # ---- weight-resident path (VAE-sized layers) ----------------------------
    def _call_resident(self, x, B, tm, Mp):
        cin, np_ = self.in_features, self.Np
        if Mp != B:
            x = jnp.pad(x, ((0, Mp - B), (0, 0)))
        xi = self.compute_dtype.itemsize
        wi = self.weight_t.dtype.itemsize
        est = 2 * tm * cin * xi + 2 * cin * np_ * wi + 2 * tm * np_ * 4 + 2 * np_ * 4
        cost = pl.CostEstimate(
            flops=2 * Mp * cin * np_,
            transcendentals=Mp * np_ if self.activation == "sigmoid" else 0,
            bytes_accessed=Mp * cin * xi + cin * np_ * wi + np_ * 4 + Mp * np_ * 4)
        kernel = functools.partial(_fc_kernel_resident, activation=self.activation)
        return pl.pallas_call(
            kernel,
            out_shape=jax.ShapeDtypeStruct((Mp, np_), jnp.float32),
            grid_spec=pltpu.PrefetchScalarGridSpec(
                num_scalar_prefetch=0,
                grid=(Mp // tm,),
                in_specs=[
                    pl.BlockSpec((tm, cin), lambda i: (i, 0)),     # x tile
                    pl.BlockSpec((cin, np_), lambda i: (0, 0)),    # weight: DMA'd once
                    pl.BlockSpec((1, np_), lambda i: (0, 0)),      # bias: DMA'd once
                ],
                out_specs=pl.BlockSpec((tm, np_), lambda i: (i, 0)),
            ),
            compiler_params=pltpu.CompilerParams(
                dimension_semantics=("parallel",), **_vmem_limit_kwargs(est)),
            cost_estimate=cost,
        )(x, self.weight_t, self.bias2d)

    # ---- general tiled path (large layers) -----------------------------------
    def _call_tiled(self, x, B, tm, Mp):
        cin = self.in_features
        tn, tk, np_, kp = self.tn, self.tk, self.Np, self.Kp
        if (Mp, kp) != (B, cin):
            x = jnp.pad(x, ((0, Mp - B), (0, kp - cin)))   # zero-K contributes nothing
        mt, nt, kt = Mp // tm, np_ // tn, kp // tk
        xi = self.compute_dtype.itemsize
        wi = self.weight_t.dtype.itemsize
        est = 2 * tm * tk * xi + 2 * tk * tn * wi + 2 * tm * tn * 4 + 2 * np_ * 4
        cost = pl.CostEstimate(
            flops=2 * Mp * kp * np_,
            transcendentals=Mp * np_ if self.activation == "sigmoid" else 0,
            # Real re-streaming: x is read nt times, the weight mt times.
            bytes_accessed=nt * Mp * kp * xi + mt * kp * np_ * wi + np_ * 4 + Mp * np_ * 4)
        kernel = functools.partial(_fc_kernel_tiled, activation=self.activation)
        return pl.pallas_call(
            kernel,
            out_shape=jax.ShapeDtypeStruct((Mp, np_), jnp.float32),
            grid_spec=pltpu.PrefetchScalarGridSpec(
                num_scalar_prefetch=0,
                grid=(mt, nt, kt),
                in_specs=[
                    pl.BlockSpec((tm, tk), lambda i, j, k: (i, k)),   # x
                    pl.BlockSpec((tk, tn), lambda i, j, k: (k, j)),   # weight (K,N layout)
                    pl.BlockSpec((nt, tn), lambda i, j, k: (0, 0)),   # whole bias, once
                ],
                out_specs=pl.BlockSpec((tm, tn), lambda i, j, k: (i, j)),
            ),
            compiler_params=pltpu.CompilerParams(
                dimension_semantics=("parallel", "parallel", "arbitrary"),
                **_vmem_limit_kwargs(est)),
            cost_estimate=cost,
        )(x, self.weight_t, self.bias_blocks)


def _reference(x, weight, bias, activation="relu"):
    out = x @ weight.T + bias
    if activation == "sigmoid":
        return jax.nn.sigmoid(out)
    return jnp.maximum(out, 0.0)


if __name__ == "__main__":
    key = jax.random.PRNGKey(0)
    kx, kw, kb, kx2, kw2, kb2 = jax.random.split(key, 6)

    # ---- primary (resident-path) test: VAE-style FC layer --------------------
    batch, in_channels, out_channels = 8, 32, 64
    x = jax.random.normal(kx, (batch, in_channels), dtype=jnp.float32)
    bound = 1.0 / (in_channels ** 0.5)
    weight = jax.random.uniform(kw, (out_channels, in_channels),
                                minval=-bound, maxval=bound, dtype=jnp.float32)
    bias = jax.random.uniform(kb, (out_channels,),
                              minval=-bound, maxval=bound, dtype=jnp.float32)

    layer_relu = FCLayerPallas(weight, bias, activation="relu")
    out = jax.block_until_ready(layer_relu(x))
    ref = _reference(x, weight, bias, "relu")
    assert out.shape == (batch, out_channels)
    assert jnp.allclose(out, ref, atol=1e-5, rtol=1e-5), "relu mismatch vs reference"

    layer_sig = FCLayerPallas(weight, bias, activation="sigmoid")
    out_s = jax.block_until_ready(layer_sig(x))
    ref_s = _reference(x, weight, bias, "sigmoid")
    assert jnp.allclose(out_s, ref_s, atol=1e-5, rtol=1e-5), "sigmoid mismatch vs reference"

    # ---- tiled fallback path, ragged sizes (forces M/N/K padding + K loop) ---
    b2_, cin2, cout2 = 16, 300, 250
    x2 = jax.random.normal(kx2, (b2_, cin2), dtype=jnp.float32)
    bound2 = 1.0 / (cin2 ** 0.5)
    w2 = jax.random.uniform(kw2, (cout2, cin2), minval=-bound2, maxval=bound2,
                            dtype=jnp.float32)
    bb2 = jax.random.uniform(kb2, (cout2,), minval=-bound2, maxval=bound2,
                             dtype=jnp.float32)
    layer_tiled = FCLayerPallas(w2, bb2, activation="relu",
                                weight_resident_limit_bytes=0,
                                tn_max=128, tk_max=128)
    out_t = jax.block_until_ready(layer_tiled(x2))
    ref_t = _reference(x2, w2, bb2, "relu")
    assert out_t.shape == (b2_, cout2)
    assert jnp.allclose(out_t, ref_t, atol=1e-4, rtol=1e-4), "tiled-path mismatch vs reference"

    print("KERNEL_OK")
</pallas_src>

<mosaic_0001>
module attributes {stable_mosaic.version = 11 : i64} {
  func.func @_fc_kernel_resident(%arg0: i32, %arg1: memref<8x32xf32, #tpu.memory_space<vmem>>, %arg2: memref<32x128xf32, #tpu.memory_space<vmem>>, %arg3: memref<1x128xf32, #tpu.memory_space<vmem>>, %arg4: memref<8x128xf32, #tpu.memory_space<vmem>>) attributes {dimension_semantics = [#tpu.dimension_semantics<parallel>], iteration_bounds = array<i64: 1>, scalar_prefetch = 0 : i64, scratch_operands = 0 : i64, tpu.core_type = #tpu.core_type<tc>, window_params = [{transform_indices = @transform_0, window_bounds = array<i64: 8, 32>}, {pipeline_mode = #tpu.pipeline_mode<synchronous>, transform_indices = @transform_1, window_bounds = array<i64: 32, 128>}, {pipeline_mode = #tpu.pipeline_mode<synchronous>, transform_indices = @transform_2, window_bounds = array<i64: 1, 128>}, {transform_indices = @transform_3, window_bounds = array<i64: 8, 128>}]} {
    %c0 = arith.constant 0 : index
    %c0_0 = arith.constant 0 : index
    %0 = vector.load %arg1[%c0, %c0_0] : memref<8x32xf32, #tpu.memory_space<vmem>>, vector<8x32xf32>
    %c0_1 = arith.constant 0 : index
    %c0_2 = arith.constant 0 : index
    %1 = vector.load %arg2[%c0_1, %c0_2] : memref<32x128xf32, #tpu.memory_space<vmem>>, vector<32x128xf32>
    %cst = arith.constant dense<0.000000e+00> : vector<8x128xf32>
    %2 = tpu.matmul %0, %1, %cst {dimension_numbers = #tpu.dot_dimension_numbers<[1], [0], [0], [1], [0, 0, 1, 1], [], []>} : vector<8x32xf32>, vector<32x128xf32>, vector<8x128xf32> -> vector<8x128xf32>
    %c0_3 = arith.constant 0 : index
    %c0_4 = arith.constant 0 : index
    %3 = vector.load %arg3[%c0_3, %c0_4] : memref<1x128xf32, #tpu.memory_space<vmem>>, vector<1x128xf32>
    %4 = vector.broadcast %3 : vector<1x128xf32> to vector<8x128xf32>
    %5 = arith.addf %2, %4 : vector<8x128xf32>
    %cst_5 = arith.constant 0.000000e+00 : f32
    %6 = vector.broadcast %cst_5 : f32 to vector<8x128xf32>
    %7 = arith.maximumf %5, %6 : vector<8x128xf32>
    %c0_6 = arith.constant 0 : index
    %c0_7 = arith.constant 0 : index
    %8 = vector.load %arg4[%c0_6, %c0_7] : memref<8x128xf32, #tpu.memory_space<vmem>>, vector<8x128xf32>
    tpu.vector_store %arg4[%c0_6, %c0_7], %7 {strides = array<i32>} : memref<8x128xf32, #tpu.memory_space<vmem>>, vector<8x128xf32>,
    return
  }
  func.func @transform_0(%arg0: i32) -> (i32, i32) {
    %c0_i32 = arith.constant 0 : i32
    %c0_i32_0 = arith.constant 0 : i32
    return %arg0, %c0_i32 : i32, i32
  }
  func.func @transform_1(%arg0: i32) -> (i32, i32) {
    %c0_i32 = arith.constant 0 : i32
    %c0_i32_0 = arith.constant 0 : i32
    %c0_i32_1 = arith.constant 0 : i32
    return %c0_i32, %c0_i32_0 : i32, i32
  }
  func.func @transform_2(%arg0: i32) -> (i32, i32) {
    %c0_i32 = arith.constant 0 : i32
    %c0_i32_0 = arith.constant 0 : i32
    %c0_i32_1 = arith.constant 0 : i32
    return %c0_i32, %c0_i32_0 : i32, i32
  }
  func.func @transform_3(%arg0: i32) -> (i32, i32) {
    %c0_i32 = arith.constant 0 : i32
    %c0_i32_0 = arith.constant 0 : i32
    return %arg0, %c0_i32 : i32, i32
  }
}

</mosaic_0001>

<llo_original>
// kernel: tpu_custom_call.1
$region0: #{tpu_custom_call.1}
  #allocation0 [shape = 'u32[]', space=smem, size = 0x4, offset = 0x4, fixed_abs, tag = 'smem constant byte address 0x4 - core index']
  #allocation1 [shape = 'u32[144,128]{1,0:T(1,128)}', space=vmem, size = 0x12000, scoped, tag = 'internal scratch']
  %s0 = inlined_call_operand.hbm [shape: f32[8,32], index: 0, kind: input, shape index: {}]
  %s1 = inlined_call_operand.hbm [shape: f32[32,128], index: 1, kind: input, shape index: {}]
  %s2 = inlined_call_operand.vmem [shape: f32[1,128], index: 2, kind: input, shape index: {}]
  %s3 = inlined_call_operand.hbm [shape: f32[8,128], index: 3, kind: output, shape index: {}]
  %s4 = sld [smem:[#allocation0]]
  $region30: #{tpu_custom_call.1} parent=0
    _
  %s6 = ssub.s32 1, %s4
  %s7 = scalar_select 0, %s6, %s4
  $region1: #{tpu_custom_call.1} parent=0
    #allocation2 [shape = 'u8[4096]{0}', space=vmem, size = 0x1000, scoped, tag = 'input window, operand 0, single buffered']
    #allocation3 [shape = 's32[1]{0}', space=sflag, size = 0x4, scoped, tag = 'scoped memory for tpu_custom_call.1']
    #allocation4 [shape = 's32[1]{0}', space=sflag, size = 0x4, scoped, tag = 'scoped memory for tpu_custom_call.1']
    #allocation5 [shape = 'u8[16384]{0}', space=vmem, size = 0x4000, scoped, tag = 'input window, operand 1, single buffered']
    #allocation6 [shape = 's32[1]{0}', space=sflag, size = 0x4, scoped, tag = 'scoped memory for tpu_custom_call.1']
    #allocation7 [shape = 'u8[4096]{0}', space=vmem, size = 0x1000, scoped, tag = 'output window, operand 0, single buffered']
    %8 = vsyncpa [#allocation3], 0
    %9 = vsyncpa [#allocation6], 0
    %10 = vsyncpa [#allocation4], 0
    // Predicated region
    $region2: #{tpu_custom_call.1} parent=1 // pred_check
      _
    $region3: #{tpu_custom_call.1} parent=1 // pred_check_branch
      %12 = sbr.rel (0) target = $region5
    $region4: #{tpu_custom_call.1} parent=1 // pred_region
      %s14 = ssub.s32 128, 128
      %15 = vsyncadd [#allocation3], %s14
      %s17 = sshll.u32 [#allocation2], 4
      %s18 = int_to_ptr.vmem [resolvable:$true] %s17
      %20 = dma.hbm_to_vmem [thread:$0]  %s0, 128, %s18, [#allocation3]
    $region5: #{tpu_custom_call.1} parent=1 // pred_fallthru
      _
    // Predicated region
    $region6: #{tpu_custom_call.1} parent=1 // pred_check
      _
    $region7: #{tpu_custom_call.1} parent=1 // pred_check_branch
      %22 = sbr.rel (0) target = $region9
    $region8: #{tpu_custom_call.1} parent=1 // pred_region
      %s24 = ssub.s32 512, 512
      %25 = vsyncadd [#allocation6], %s24
      %s26 = sshll.u32 [#allocation5], 4
      %s27 = int_to_ptr.vmem [resolvable:$true] %s26
      %32 = dma.hbm_to_vmem [thread:$0]  %s1, 512, %s27, [#allocation6], 128, 128, 8
    $region9: #{tpu_custom_call.1} parent=1 // pred_fallthru
      _
    // Predicated region
    $region10: #{tpu_custom_call.1} parent=1 // pred_check
      _
    $region11: #{tpu_custom_call.1} parent=1 // pred_check_branch
      %34 = sbr.rel (0) target = $region13
    $region12: #{tpu_custom_call.1} parent=1 // pred_region
      _
    $region13: #{tpu_custom_call.1} parent=1 // pred_fallthru
      _
    // Predicated region
    $region14: #{tpu_custom_call.1} parent=1 // pred_check
      _
    $region15: #{tpu_custom_call.1} parent=1 // pred_check_branch
      %36 = sbr.rel (0) target = $region17
    $region16: #{tpu_custom_call.1} parent=1 // pred_region
      %37 = dma.done [#allocation3], 128
    $region17: #{tpu_custom_call.1} parent=1 // pred_fallthru
      _
    // Predicated region
    $region18: #{tpu_custom_call.1} parent=1 // pred_check
      _
    $region19: #{tpu_custom_call.1} parent=1 // pred_check_branch
      %39 = sbr.rel (0) target = $region21
    $region20: #{tpu_custom_call.1} parent=1 // pred_region
      %40 = dma.done [#allocation6], 512
    $region21: #{tpu_custom_call.1} parent=1 // pred_fallthru
      _
    %v41 = vld [vmem:[#allocation2] sm:$0xff]
    %v42 = vld [vmem:[#allocation5] sm:$0xff]
    %v43 = vld [vmem:[#allocation5 + $0x8] sm:$0xff]
    %v44 = vld [vmem:[#allocation5 + $0x10] sm:$0xff]
    %v45 = vld [vmem:[#allocation5 + $0x18] sm:$0xff]
    %v46 = vld [vmem:[%s2] sm:$0x1]
    %v48 = vlaneseq
    %v49 = vshrl.u32 %v48, 7
    %v50 = vsub.s32 0, %v49
    %v51 = vrot.slane %v46, %v50
    %vm53 = vcmask 261120
    %v55 = vsel %vm53, %v41, 0
    %57 = vmatprep.subr.mxu0 0.0
    %58 = vmatpush1.msra.mxu0 0.0
    %59 = vmatprep.subr.mxu0 0.0
    %60 = vmatpush1.msra.mxu0 0.0
    %61 = vmatprep.subr.mxu0 0.0
    %62 = vmatpush1.msra.mxu0 0.0
    %63 = vmatprep.subr.mxu0 0.0
    %64 = vmatpush1.msra.mxu0 0.0
    %65 = vmatprep.subr.mxu0 0.0
    %66 = vmatpush1.msra.mxu0 0.0
    %67 = vmatprep.subr.mxu0 0.0
    %68 = vmatpush1.msra.mxu0 0.0
    %69 = vmatprep.subr.mxu0 0.0
    %70 = vmatpush1.msra.mxu0 0.0
    %71 = vmatprep.subr.mxu0 0.0
    %72 = vmatpush1.msra.mxu0 0.0
    %73 = vmatprep.subr.mxu0 0.0
    %74 = vmatpush1.msra.mxu0 0.0
    %75 = vmatprep.subr.mxu0 0.0
    %76 = vmatpush1.msra.mxu0 0.0
    %77 = vmatprep.subr.mxu0 0.0
    %78 = vmatpush1.msra.mxu0 0.0
    %79 = vmatprep.subr.mxu0 0.0
    %80 = vmatpush1.msra.mxu0 0.0
    %81 = vmatprep.subr.mxu0 0.0
    %82 = vmatpush1.msra.mxu0 %v45
    %83 = vmatprep.subr.mxu0 0.0
    %84 = vmatpush1.msra.mxu0 %v44
    %85 = vmatprep.subr.mxu0 0.0
    %86 = vmatpush1.msra.mxu0 %v43
    %87 = vmatprep.subr.mxu0 0.0
    %88 = vmatpush1.msra.mxu0 %v42
    %89 = vmatprep.subr.mxu0 0.0
    %90 = vmatpush2.msra.mxu0 0.0
    %91 = vmatprep.subr.mxu0 0.0
    %92 = vmatpush2.msra.mxu0 0.0
    %93 = vmatprep.subr.mxu0 0.0
    %94 = vmatpush2.msra.mxu0 0.0
    %95 = vmatprep.subr.mxu0 0.0
    %96 = vmatpush2.msra.mxu0 0.0
    %97 = vmatprep.subr.mxu0 0.0
    %98 = vmatpush2.msra.mxu0 0.0
    %99 = vmatprep.subr.mxu0 0.0
    %100 = vmatpush2.msra.mxu0 0.0
    %101 = vmatprep.subr.mxu0 0.0
    %102 = vmatpush2.msra.mxu0 0.0
    %103 = vmatprep.subr.mxu0 0.0
    %104 = vmatpush2.msra.mxu0 0.0
    %105 = vmatprep.subr.mxu0 0.0
    %106 = vmatpush2.msra.mxu0 0.0
    %107 = vmatprep.subr.mxu0 0.0
    %108 = vmatpush2.msra.mxu0 0.0
    %109 = vmatprep.subr.mxu0 0.0
    %110 = vmatpush2.msra.mxu0 0.0
    %111 = vmatprep.subr.mxu0 0.0
    %112 = vmatpush2.msra.mxu0 0.0
    %113 = vmatprep.subr.mxu0 0.0
    %114 = vmatpush2.msra.mxu0 0.0
    %115 = vmatprep.subr.mxu0 0.0
    %116 = vmatpush2.msra.mxu0 0.0
    %117 = vmatprep.subr.mxu0 0.0
    %118 = vmatpush2.msra.mxu0 0.0
    %119 = vmatprep.subr.mxu0 0.0
    %120 = vmatpush2.msra.mxu0 0.0
    %121 = vmatprep.mubr.f32.mxu0 0.0
    %122 = vmatmul.mubr.f32.gmra.mxu0 %v55
    %v123 = vpop.f32.mrf.mxu0
    %v124 = vadd.f32 %v51, %v123
    %v125 = vpop.f32.mrf.mxu0
    %126 = vdwg.mxu0
    %v127 = vmax.f32 %v124, 0.0
    %128 = vst [vmem:[#allocation7] sm:$0xff] %v127
    // Predicated region
    $region22: #{tpu_custom_call.1} parent=1 // pred_check
      _
    $region23: #{tpu_custom_call.1} parent=1 // pred_check_branch
      %130 = sbr.rel (0) target = $region25
    $region24: #{tpu_custom_call.1} parent=1 // pred_region
      %s132 = ssub.s32 128, 128
      %133 = vsyncadd [#allocation4], %s132
      %s135 = sshll.u32 [#allocation7], 4
      %s136 = int_to_ptr.vmem [resolvable:$true] %s135
      %138 = dma.vmem_to_hbm [thread:$0]  %s136, 128, %s3, [#allocation4]
    $region25: #{tpu_custom_call.1} parent=1 // pred_fallthru
      _
    // Predicated region
    $region26: #{tpu_custom_call.1} parent=1 // pred_check
      _
    $region27: #{tpu_custom_call.1} parent=1 // pred_check_branch
      %140 = sbr.rel (0) target = $region29
    $region28: #{tpu_custom_call.1} parent=1 // pred_region
      %141 = dma.done [#allocation4], 128
    $region29: #{tpu_custom_call.1} parent=1 // pred_fallthru
      _
    %142 = vsyncpa [#allocation3], 1
    %143 = vsyncpa [#allocation6], 1
    %144 = vsyncpa [#allocation4], 1

</llo_original>
